<compile_context>
chip_gen: v6e
topology: v6e:2x2x1
jax: 0.10.0
libtpu: 0.0.40
codegen_flags: <defaults>
</compile_context>

<pallas_src>
import jax
import jax.numpy as jnp
from jax.experimental import pallas as pl
from jax.experimental.pallas import tpu as pltpu

EPS = 1e-5


def _round_up(x, m):
    return (x + m - 1) // m * m


def _device_caps():
    """(vmem_cap_bytes, default_batch_tile) for the local TPU generation."""
    try:
        kind = jax.devices()[0].device_kind.lower()
    except Exception:
        kind = ""
    is_v7 = ("7x" in kind) or ("v7" in kind)
    has_128mib_vmem = (not is_v7) and any(t in kind for t in ("v4", "v5", "v6"))
    vmem_cap = (100 << 20) if has_128mib_vmem else (56 << 20)
    default_bt = 256 if is_v7 else 512
    return vmem_cap, default_bt


def _vmem_limit_bytes(bt, f_pad, h_pad, cap):
    # Pallas double-buffers every BlockSpec operand by default, including the
    # constant-index "resident" ones, so count them twice.
    resident = (f_pad * h_pad * 2          # W1 (bf16)
                + h_pad * h_pad * 2        # W2 (bf16)
                + 2 * f_pad * 4            # scale, shift
                + 2 * h_pad * 4)           # b1, b2
    streamed = bt * f_pad * 4 + bt * h_pad * 4      # x tile + out tile
    temps = (bt * f_pad + 2 * bt * h_pad) * 4       # xn / h1 / h2 temporaries
    need = 2 * resident + 2 * streamed + temps
    return int(min(cap, max(32 << 20, int(1.5 * need))))


# ----------------------------- kernels ------------------------------------ #

def stats_kernel(nvalid_ref, x_ref, gamma_ref, beta_ref, scale_ref, shift_ref):
    """Accumulate per-feature sum / sum-of-squares over the batch-tiled grid axis,
    then finalize into the folded BatchNorm affine:  y = x * scale + shift."""
    i = pl.program_id(0)

    @pl.when(i == 0)
    def _():
        scale_ref[...] = jnp.zeros_like(scale_ref)   # running sum(x)
        shift_ref[...] = jnp.zeros_like(shift_ref)   # running sum(x*x)

    x = x_ref[...]                                   # (BT, F_pad) f32
    bt = x.shape[0]
    row = jax.lax.broadcasted_iota(jnp.int32, x.shape, 0) + i * bt
    xm = jnp.where(row < nvalid_ref[0], x, 0.0)      # mask ragged last batch tile
    scale_ref[...] += jnp.sum(xm, axis=0, keepdims=True)
    shift_ref[...] += jnp.sum(xm * xm, axis=0, keepdims=True)

    @pl.when(i == pl.num_programs(0) - 1)
    def _():
        inv_n = 1.0 / nvalid_ref[0].astype(jnp.float32)
        mean = scale_ref[...] * inv_n
        # TODO(synk): E[x^2]-mean^2 in f32 can lose precision vs PyTorch's two-pass
        # variance for very large B or badly-centered inputs (Welford merge would fix).
        var = jnp.maximum(shift_ref[...] * inv_n - mean * mean, 0.0)   # biased var
        scale = gamma_ref[...] * jax.lax.rsqrt(var + EPS)
        scale_ref[...] = scale
        shift_ref[...] = beta_ref[...] - mean * scale


def mlp_kernel(x_ref, scale_ref, shift_ref, w1_ref, b1_ref, w2_ref, b2_ref, o_ref):
    x = x_ref[...]                                               # (BT, F_pad) f32

    # Folded BatchNorm (single multiply-add, f32).
    xn = x * scale_ref[...] + shift_ref[...]

    # fc1 + ReLU: bf16 operands on the MXU, f32 accumulation.
    h1 = jnp.dot(xn.astype(jnp.bfloat16), w1_ref[...],
                 preferred_element_type=jnp.float32) + b1_ref[...]
    h1 = jnp.maximum(h1, 0.0)

    # fc2 + ReLU.
    h2 = jnp.dot(h1.astype(jnp.bfloat16), w2_ref[...],
                 preferred_element_type=jnp.float32) + b2_ref[...]
    h2 = jnp.maximum(h2, 0.0)

    o_ref[...] = h2.astype(o_ref.dtype)


# ----------------------------- wrapper ------------------------------------ #

def prepare_params(gamma, beta, w1, b1, w2, b2):
    """One-time padding to lane-dense (multiple-of-128) feature/hidden dims and bf16
    cast of the weights. Hoisted out of the per-call forward path (weights are static).
    w1: (F, H), w2: (H, H), pre-transposed to (in, out); gamma/beta/b1/b2: row vectors."""
    F, H = w1.shape
    F_pad, H_pad = _round_up(F, 128), _round_up(H, 128)

    def pad(a, rows, cols):
        return a if (rows == 0 and cols == 0) else jnp.pad(a, ((0, rows), (0, cols)))

    return {
        "F": F, "H": H, "F_pad": F_pad, "H_pad": H_pad,
        "gamma": pad(gamma.reshape(1, F), 0, F_pad - F),
        "beta": pad(beta.reshape(1, F), 0, F_pad - F),
        "w1": pad(w1, F_pad - F, H_pad - H).astype(jnp.bfloat16),
        "b1": pad(b1.reshape(1, H), 0, H_pad - H),
        "w2": pad(w2, H_pad - H, H_pad - H).astype(jnp.bfloat16),
        "b2": pad(b2.reshape(1, H), 0, H_pad - H),
    }


def downstream_forward(x, params, *, batch_tile=None):
    """x: (B, F) f32 -> (B, H) f32, train-mode BatchNorm1d -> fc1 -> ReLU -> fc2 -> ReLU."""
    B, F = x.shape
    assert F == params["F"], "feature dim mismatch vs prepared params"
    F_pad, H_pad, H = params["F_pad"], params["H_pad"], params["H"]

    vmem_cap, default_bt = _device_caps()
    if batch_tile is None:
        batch_tile = default_bt

    # Balanced batch tiling: multiple of 8, ~<= batch_tile, minimal ragged waste.
    n_tiles = max(1, pl.cdiv(B, batch_tile))
    BT = _round_up(pl.cdiv(B, n_tiles), 8)
    n_bt = pl.cdiv(B, BT)

    # Feature padding only when F is not a multiple of 128; never pad the batch dim
    # (ragged last tile is masked in-kernel), except the tiny-B corner case below.
    xp = x if F_pad == F else jnp.pad(x, ((0, 0), (0, F_pad - F)))
    B_rows = max(B, BT)
    if xp.shape[0] < B_rows:                 # only when B < 8 (block min sublane count)
        xp = jnp.pad(xp, ((0, B_rows - xp.shape[0]), (0, 0)))

    nvalid = jnp.array([B], jnp.int32)
    vmem_limit = _vmem_limit_bytes(BT, F_pad, H_pad, vmem_cap)
    smem_spec = pl.BlockSpec(memory_space=pltpu.MemorySpace.SMEM)

    # Pass 1: batch statistics (reduction over the batch-tile axis), folded into
    # a single scale/shift affine.
    scale, shift = pl.pallas_call(
        stats_kernel,
        out_shape=(jax.ShapeDtypeStruct((1, F_pad), jnp.float32),
                   jax.ShapeDtypeStruct((1, F_pad), jnp.float32)),
        grid=(n_bt,),
        in_specs=[smem_spec,                                   # nvalid (SMEM scalar)
                  pl.BlockSpec((BT, F_pad), lambda i: (i, 0)),  # x tile (streamed)
                  pl.BlockSpec((1, F_pad), lambda i: (0, 0)),   # gamma  (resident)
                  pl.BlockSpec((1, F_pad), lambda i: (0, 0))],  # beta   (resident)
        out_specs=(pl.BlockSpec((1, F_pad), lambda i: (0, 0)),
                   pl.BlockSpec((1, F_pad), lambda i: (0, 0))),
        compiler_params=pltpu.CompilerParams(
            dimension_semantics=("arbitrary",),
            vmem_limit_bytes=vmem_limit),
    )(nvalid, xp, params["gamma"], params["beta"])

    # Pass 2: scale/shift + fc1 + ReLU + fc2 + ReLU, batch-parallel, resident weights.
    out_padded = pl.pallas_call(
        mlp_kernel,
        out_shape=jax.ShapeDtypeStruct((B_rows, H_pad), jnp.float32),
        grid=(n_bt,),
        in_specs=[
            pl.BlockSpec((BT, F_pad), lambda i: (i, 0)),      # x tile   (streamed)
            pl.BlockSpec((1, F_pad), lambda i: (0, 0)),       # scale    (resident)
            pl.BlockSpec((1, F_pad), lambda i: (0, 0)),       # shift    (resident)
            pl.BlockSpec((F_pad, H_pad), lambda i: (0, 0)),   # W1 bf16  (resident)
            pl.BlockSpec((1, H_pad), lambda i: (0, 0)),       # b1       (resident)
            pl.BlockSpec((H_pad, H_pad), lambda i: (0, 0)),   # W2 bf16  (resident)
            pl.BlockSpec((1, H_pad), lambda i: (0, 0)),       # b2       (resident)
        ],
        out_specs=pl.BlockSpec((BT, H_pad), lambda i: (i, 0)),
        compiler_params=pltpu.CompilerParams(
            dimension_semantics=("parallel",),
            vmem_limit_bytes=vmem_limit),
    )(xp, scale, shift, params["w1"], params["b1"], params["w2"], params["b2"])

    return out_padded[:B, :H]


# ----------------------------- reference ---------------------------------- #

def reference_forward(x, gamma, beta, w1, b1, w2, b2):
    """Pure-JAX f32 reference mirroring PyTorch train-mode semantics."""
    mean = jnp.mean(x, axis=0, keepdims=True)
    var = jnp.mean((x - mean) ** 2, axis=0, keepdims=True)   # biased variance
    xn = (x - mean) / jnp.sqrt(var + EPS) * gamma + beta
    h1 = jnp.maximum(xn @ w1 + b1, 0.0)
    h2 = jnp.maximum(h1 @ w2 + b2, 0.0)
    return h2


if __name__ == "__main__":
    key = jax.random.PRNGKey(0)
    B, input_size, hidden_size = 8, 32, 32

    k_x, k_g, k_b, k_w1, k_b1, k_w2, k_b2 = jax.random.split(key, 7)

    x = jax.random.normal(k_x, (B, input_size), dtype=jnp.float32)

    # BatchNorm1d affine params (perturbed deterministically so the affine path is used).
    gamma = jnp.ones((1, input_size), jnp.float32) + 0.1 * jax.random.normal(
        k_g, (1, input_size), dtype=jnp.float32)
    beta = 0.1 * jax.random.normal(k_b, (1, input_size), dtype=jnp.float32)

    # Linear weights, stored pre-transposed as (in, out).
    bound1 = 1.0 / jnp.sqrt(input_size)
    w1 = jax.random.uniform(k_w1, (input_size, hidden_size), jnp.float32,
                            -bound1, bound1)
    b1 = jax.random.uniform(k_b1, (1, hidden_size), jnp.float32, -bound1, bound1)

    bound2 = 1.0 / jnp.sqrt(hidden_size)
    w2 = jax.random.uniform(k_w2, (hidden_size, hidden_size), jnp.float32,
                            -bound2, bound2)
    b2 = jax.random.uniform(k_b2, (1, hidden_size), jnp.float32, -bound2, bound2)

    params = prepare_params(gamma, beta, w1, b1, w2, b2)   # one-time pad + bf16 cast
    out = downstream_forward(x, params)
    out = jax.block_until_ready(out)

    ref = reference_forward(x, gamma, beta, w1, b1, w2, b2)
    assert out.shape == (B, hidden_size)
    # Tolerance accommodates the bf16 MXU operands (f32 accumulation).
    assert jnp.allclose(out, ref, atol=3e-2, rtol=3e-2), "mismatch vs reference"

    print("KERNEL_OK")
</pallas_src>

<mosaic_0001>
module attributes {stable_mosaic.version = 11 : i64} {
  func.func @stats_kernel(%arg0: i32, %arg1: memref<1xi32, #tpu.memory_space<smem>>, %arg2: memref<8x128xf32, #tpu.memory_space<vmem>>, %arg3: memref<1x128xf32, #tpu.memory_space<vmem>>, %arg4: memref<1x128xf32, #tpu.memory_space<vmem>>, %arg5: memref<1x128xf32, #tpu.memory_space<vmem>>, %arg6: memref<1x128xf32, #tpu.memory_space<vmem>>) attributes {dimension_semantics = [#tpu.dimension_semantics<arbitrary>], iteration_bounds = array<i64: 1>, scalar_prefetch = 0 : i64, scratch_operands = 0 : i64, tpu.core_type = #tpu.core_type<tc>, window_params = [{transform_indices = @transform_0, window_bounds = array<i64: 1>}, {transform_indices = @transform_1, window_bounds = array<i64: 8, 128>}, {pipeline_mode = #tpu.pipeline_mode<synchronous>, transform_indices = @transform_2, window_bounds = array<i64: 1, 128>}, {pipeline_mode = #tpu.pipeline_mode<synchronous>, transform_indices = @transform_3, window_bounds = array<i64: 1, 128>}, {pipeline_mode = #tpu.pipeline_mode<synchronous>, transform_indices = @transform_4, window_bounds = array<i64: 1, 128>}, {pipeline_mode = #tpu.pipeline_mode<synchronous>, transform_indices = @transform_5, window_bounds = array<i64: 1, 128>}]} {
    %c0_i32 = arith.constant 0 : i32
    %0 = arith.cmpi eq, %arg0, %c0_i32 : i32
    %1 = arith.extui %0 : i1 to i32
    %c0_i32_0 = arith.constant 0 : i32
    %2 = arith.cmpi ne, %1, %c0_i32_0 : i32
    scf.if %2 {
      %cst_15 = arith.constant 0.000000e+00 : f32
      %27 = vector.broadcast %cst_15 : f32 to vector<1x128xf32>
      %c0_16 = arith.constant 0 : index
      %c0_17 = arith.constant 0 : index
      %28 = vector.load %arg5[%c0_16, %c0_17] : memref<1x128xf32, #tpu.memory_space<vmem>>, vector<1x128xf32>
      tpu.vector_store %arg5[%c0_16, %c0_17], %27 {strides = array<i32>} : memref<1x128xf32, #tpu.memory_space<vmem>>, vector<1x128xf32>,
      %cst_18 = arith.constant 0.000000e+00 : f32
      %29 = vector.broadcast %cst_18 : f32 to vector<1x128xf32>
      %c0_19 = arith.constant 0 : index
      %c0_20 = arith.constant 0 : index
      %30 = vector.load %arg6[%c0_19, %c0_20] : memref<1x128xf32, #tpu.memory_space<vmem>>, vector<1x128xf32>
      tpu.vector_store %arg6[%c0_19, %c0_20], %29 {strides = array<i32>} : memref<1x128xf32, #tpu.memory_space<vmem>>, vector<1x128xf32>,
    } else {
    }
    %c0 = arith.constant 0 : index
    %c0_1 = arith.constant 0 : index
    %3 = vector.load %arg2[%c0, %c0_1] : memref<8x128xf32, #tpu.memory_space<vmem>>, vector<8x128xf32>
    %4 = tpu.iota {dimensions = array<i32: 0>} : vector<8x128xi32>
    %c8_i32 = arith.constant 8 : i32
    %5 = arith.muli %arg0, %c8_i32 : i32
    %6 = vector.broadcast %5 : i32 to vector<8x128xi32>
    %7 = arith.addi %4, %6 : vector<8x128xi32>
    %c0_2 = arith.constant 0 : index
    %8 = memref.load %arg1[%c0_2] : memref<1xi32, #tpu.memory_space<smem>>
    %9 = vector.broadcast %8 : i32 to vector<8x128xi32>
    %10 = arith.cmpi slt, %7, %9 : vector<8x128xi32>
    %cst = arith.constant 0.000000e+00 : f32
    %11 = vector.broadcast %cst : f32 to vector<8x128xf32>
    %12 = arith.select %10, %3, %11 : vector<8x128xi1>, vector<8x128xf32>
    %c0_3 = arith.constant 0 : index
    %c0_4 = arith.constant 0 : index
    %13 = vector.load %arg5[%c0_3, %c0_4] : memref<1x128xf32, #tpu.memory_space<vmem>>, vector<1x128xf32>
    %cst_5 = arith.constant dense<0.000000e+00> : vector<128xf32>
    %14 = vector.multi_reduction <add>, %12, %cst_5 [0] : vector<8x128xf32> to vector<128xf32>
    %15 = vector.shape_cast %14 : vector<128xf32> to vector<1x128xf32>
    %16 = arith.addf %13, %15 : vector<1x128xf32>
    %c0_6 = arith.constant 0 : index
    %c0_7 = arith.constant 0 : index
    %17 = vector.load %arg5[%c0_6, %c0_7] : memref<1x128xf32, #tpu.memory_space<vmem>>, vector<1x128xf32>
    tpu.vector_store %arg5[%c0_6, %c0_7], %16 {strides = array<i32>} : memref<1x128xf32, #tpu.memory_space<vmem>>, vector<1x128xf32>,
    %c0_8 = arith.constant 0 : index
    %c0_9 = arith.constant 0 : index
    %18 = vector.load %arg6[%c0_8, %c0_9] : memref<1x128xf32, #tpu.memory_space<vmem>>, vector<1x128xf32>
    %19 = arith.mulf %12, %12 : vector<8x128xf32>
    %cst_10 = arith.constant dense<0.000000e+00> : vector<128xf32>
    %20 = vector.multi_reduction <add>, %19, %cst_10 [0] : vector<8x128xf32> to vector<128xf32>
    %21 = vector.shape_cast %20 : vector<128xf32> to vector<1x128xf32>
    %22 = arith.addf %18, %21 : vector<1x128xf32>
    %c0_11 = arith.constant 0 : index
    %c0_12 = arith.constant 0 : index
    %23 = vector.load %arg6[%c0_11, %c0_12] : memref<1x128xf32, #tpu.memory_space<vmem>>, vector<1x128xf32>
    tpu.vector_store %arg6[%c0_11, %c0_12], %22 {strides = array<i32>} : memref<1x128xf32, #tpu.memory_space<vmem>>, vector<1x128xf32>,
    %c0_i32_13 = arith.constant 0 : i32
    %24 = arith.cmpi eq, %arg0, %c0_i32_13 : i32
    %25 = arith.extui %24 : i1 to i32
    %c0_i32_14 = arith.constant 0 : i32
    %26 = arith.cmpi ne, %25, %c0_i32_14 : i32
    scf.if %26 {
      %c0_15 = arith.constant 0 : index
      %27 = memref.load %arg1[%c0_15] : memref<1xi32, #tpu.memory_space<smem>>
      %28 = arith.sitofp %27 : i32 to f32
      %cst_16 = arith.constant 1.000000e+00 : f32
      %29 = arith.divf %cst_16, %28 : f32
      %c0_17 = arith.constant 0 : index
      %c0_18 = arith.constant 0 : index
      %30 = vector.load %arg5[%c0_17, %c0_18] : memref<1x128xf32, #tpu.memory_space<vmem>>, vector<1x128xf32>
      %31 = vector.broadcast %29 : f32 to vector<1x128xf32>
      %32 = arith.mulf %30, %31 : vector<1x128xf32>
      %c0_19 = arith.constant 0 : index
      %c0_20 = arith.constant 0 : index
      %33 = vector.load %arg6[%c0_19, %c0_20] : memref<1x128xf32, #tpu.memory_space<vmem>>, vector<1x128xf32>
      %34 = vector.broadcast %29 : f32 to vector<1x128xf32>
      %35 = arith.mulf %33, %34 : vector<1x128xf32>
      %36 = arith.mulf %32, %32 : vector<1x128xf32>
      %37 = arith.subf %35, %36 : vector<1x128xf32>
      %cst_21 = arith.constant 0.000000e+00 : f32
      %38 = vector.broadcast %cst_21 : f32 to vector<1x128xf32>
      %39 = arith.maximumf %37, %38 : vector<1x128xf32>
      %c0_22 = arith.constant 0 : index
      %c0_23 = arith.constant 0 : index
      %40 = vector.load %arg3[%c0_22, %c0_23] : memref<1x128xf32, #tpu.memory_space<vmem>>, vector<1x128xf32>
      %cst_24 = arith.constant 9.99999974E-6 : f32
      %41 = vector.broadcast %cst_24 : f32 to vector<1x128xf32>
      %42 = arith.addf %39, %41 : vector<1x128xf32>
      %43 = math.rsqrt %42 : vector<1x128xf32>
      %44 = arith.mulf %40, %43 : vector<1x128xf32>
      %c0_25 = arith.constant 0 : index
      %c0_26 = arith.constant 0 : index
      %45 = vector.load %arg5[%c0_25, %c0_26] : memref<1x128xf32, #tpu.memory_space<vmem>>, vector<1x128xf32>
      tpu.vector_store %arg5[%c0_25, %c0_26], %44 {strides = array<i32>} : memref<1x128xf32, #tpu.memory_space<vmem>>, vector<1x128xf32>,
      %c0_27 = arith.constant 0 : index
      %c0_28 = arith.constant 0 : index
      %46 = vector.load %arg4[%c0_27, %c0_28] : memref<1x128xf32, #tpu.memory_space<vmem>>, vector<1x128xf32>
      %47 = arith.mulf %32, %44 : vector<1x128xf32>
      %48 = arith.subf %46, %47 : vector<1x128xf32>
      %c0_29 = arith.constant 0 : index
      %c0_30 = arith.constant 0 : index
      %49 = vector.load %arg6[%c0_29, %c0_30] : memref<1x128xf32, #tpu.memory_space<vmem>>, vector<1x128xf32>
      tpu.vector_store %arg6[%c0_29, %c0_30], %48 {strides = array<i32>} : memref<1x128xf32, #tpu.memory_space<vmem>>, vector<1x128xf32>,
    } else {
    }
    return
  }
  func.func @transform_0(%arg0: i32) -> i32 {
    %c0_i32 = arith.constant 0 : i32
    %c0_i32_0 = arith.constant 0 : i32
    return %c0_i32 : i32
  }
  func.func @transform_1(%arg0: i32) -> (i32, i32) {
    %c0_i32 = arith.constant 0 : i32
    %c0_i32_0 = arith.constant 0 : i32
    return %arg0, %c0_i32 : i32, i32
  }
  func.func @transform_2(%arg0: i32) -> (i32, i32) {
    %c0_i32 = arith.constant 0 : i32
    %c0_i32_0 = arith.constant 0 : i32
    %c0_i32_1 = arith.constant 0 : i32
    return %c0_i32, %c0_i32_0 : i32, i32
  }
  func.func @transform_3(%arg0: i32) -> (i32, i32) {
    %c0_i32 = arith.constant 0 : i32
    %c0_i32_0 = arith.constant 0 : i32
    %c0_i32_1 = arith.constant 0 : i32
    return %c0_i32, %c0_i32_0 : i32, i32
  }
  func.func @transform_4(%arg0: i32) -> (i32, i32) {
    %c0_i32 = arith.constant 0 : i32
    %c0_i32_0 = arith.constant 0 : i32
    %c0_i32_1 = arith.constant 0 : i32
    return %c0_i32, %c0_i32_0 : i32, i32
  }
  func.func @transform_5(%arg0: i32) -> (i32, i32) {
    %c0_i32 = arith.constant 0 : i32
    %c0_i32_0 = arith.constant 0 : i32
    %c0_i32_1 = arith.constant 0 : i32
    return %c0_i32, %c0_i32_0 : i32, i32
  }
}

</mosaic_0001>

<llo_original>
// kernel: tpu_custom_call.1
$region0: #{tpu_custom_call.1}
  #allocation0 [shape = 'u32[]', space=smem, size = 0x4, offset = 0x4, fixed_abs, tag = 'smem constant byte address 0x4 - core index']
  #allocation1 [shape = 'u32[144,128]{1,0:T(1,128)}', space=vmem, size = 0x12000, scoped, tag = 'internal scratch']
  #allocation2 [shape = 's32[1]{0:T(128)S(6)}', space=smem, size = 0x200, scoped, tag = 'scoped memory for tpu_custom_call.1']
  %s0 = inlined_call_operand.<no memory space> [shape: s32[1], index: 0, kind: input, shape index: {}]
  %s1 = inlined_call_operand.hbm [shape: f32[8,128], index: 1, kind: input, shape index: {}]
  %s2 = inlined_call_operand.vmem [shape: f32[1,128], index: 2, kind: input, shape index: {}]
  %s3 = inlined_call_operand.vmem [shape: f32[1,128], index: 3, kind: input, shape index: {}]
  %s4 = inlined_call_operand.hbm [shape: f32[1,128], index: 4, kind: output, shape index: {0}]
  %s5 = inlined_call_operand.hbm [shape: f32[1,128], index: 5, kind: output, shape index: {1}]
  %6 = xla_tuple %s4, %s5
  %s7 = sld [smem:[#allocation0]]
  $region46: #{tpu_custom_call.1} parent=0
    _
  %s9 = ssub.s32 1, %s7
  %s10 = scalar_select 0, %s9, %s7
  %11 = sst [smem:[#allocation2]] %s0
  $region1: #{tpu_custom_call.1} parent=0
    #allocation3 [shape = 'u8[4096]{0}', space=vmem, size = 0x1000, scoped, tag = 'input window, operand 1, single buffered']
    #allocation4 [shape = 's32[1]{0}', space=sflag, size = 0x4, scoped, tag = 'scoped memory for tpu_custom_call.1']
    #allocation5 [shape = 's32[1]{0}', space=sflag, size = 0x4, scoped, tag = 'scoped memory for tpu_custom_call.1']
    #allocation6 [shape = 'u8[512]{0}', space=vmem, size = 0x400, scoped, tag = 'output window, operand 0, single buffered']
    #allocation7 [shape = 'u8[512]{0}', space=vmem, size = 0x400, scoped, tag = 'output window, operand 1, single buffered']
    #allocation8 [shape = 's32[1]{0}', space=sflag, size = 0x4, scoped, tag = 'scoped memory for tpu_custom_call.1']
    %12 = vsyncpa [#allocation4], 0
    %13 = vsyncpa [#allocation5], 0
    %14 = vsyncpa [#allocation8], 0
    // Predicated region
    $region2: #{tpu_custom_call.1} parent=1 // pred_check
      _
    $region3: #{tpu_custom_call.1} parent=1 // pred_check_branch
      %16 = sbr.rel (0) target = $region5
    $region4: #{tpu_custom_call.1} parent=1 // pred_region
      _
    $region5: #{tpu_custom_call.1} parent=1 // pred_fallthru
      _
    // Predicated region
    $region6: #{tpu_custom_call.1} parent=1 // pred_check
      _
    $region7: #{tpu_custom_call.1} parent=1 // pred_check_branch
      %18 = sbr.rel (0) target = $region9
    $region8: #{tpu_custom_call.1} parent=1 // pred_region
      %s20 = ssub.s32 128, 128
      %21 = vsyncadd [#allocation4], %s20
      %s23 = sshll.u32 [#allocation3], 4
      %s24 = int_to_ptr.vmem [resolvable:$true] %s23
      %26 = dma.hbm_to_vmem [thread:$0]  %s1, 128, %s24, [#allocation4]
    $region9: #{tpu_custom_call.1} parent=1 // pred_fallthru
      _
    // Predicated region
    $region10: #{tpu_custom_call.1} parent=1 // pred_check
      _
    $region11: #{tpu_custom_call.1} parent=1 // pred_check_branch
      %28 = sbr.rel (0) target = $region13
    $region12: #{tpu_custom_call.1} parent=1 // pred_region
      _
    $region13: #{tpu_custom_call.1} parent=1 // pred_fallthru
      _
    // Predicated region
    $region14: #{tpu_custom_call.1} parent=1 // pred_check
      _
    $region15: #{tpu_custom_call.1} parent=1 // pred_check_branch
      %30 = sbr.rel (0) target = $region17
    $region16: #{tpu_custom_call.1} parent=1 // pred_region
      _
    $region17: #{tpu_custom_call.1} parent=1 // pred_fallthru
      _
    // Predicated region
    $region18: #{tpu_custom_call.1} parent=1 // pred_check
      _
    $region19: #{tpu_custom_call.1} parent=1 // pred_check_branch
      %32 = sbr.rel (0) target = $region21
    $region20: #{tpu_custom_call.1} parent=1 // pred_region
      %33 = dma.done [#allocation4], 128
    $region21: #{tpu_custom_call.1} parent=1 // pred_fallthru
      _
    %p34 = scmp.eq.s32.totalorder 0, 0
    // Predicated region
    $region22: #{tpu_custom_call.1} parent=1 // pred_check
      %p35 = pneg %p34
    $region23: #{tpu_custom_call.1} parent=1 // pred_check_branch
      %37 = sbr.rel (%p35) target = $region25
    $region24: #{tpu_custom_call.1} parent=1 // pred_region
      %38 = vst [vmem:[#allocation6] sm:$0x1] 0.0
      %39 = vst [vmem:[#allocation7] sm:$0x1] 0.0
    $region25: #{tpu_custom_call.1} parent=1 // pred_fallthru
      _
    %v40 = vld [vmem:[#allocation3] sm:$0xff]
    %v41 = vlaneseq
    %v42 = vshrl.u32 %v41, 7
    %s43 = smul.u32 0, 8
    %v44 = vstv %s43
    %v45 = vadd.s32 %v42, %v44
    %s46 = sld [smem:[#allocation2]]
    %v47 = vstv %s46
    %vm48 = vcmp.lt.s32.totalorder %v45, %v47
    %v49 = vsel %vm48, %v40, 0.0
    %v50 = vld [vmem:[#allocation6] sm:$0x1]
    %v51 = vrot.slane %v49, 4
    %v52 = vadd.f32 %v49, %v51
    %v53 = vrot.slane %v52, 2
    %v54 = vadd.f32 %v52, %v53
    %v55 = vrot.slane %v54, 1
    %v56 = vadd.f32 %v54, %v55
    %v57 = vadd.f32 %v50, %v56
    %58 = vst [vmem:[#allocation6] sm:$0x1] %v57
    %v59 = vld [vmem:[#allocation7] sm:$0x1]
    %v60 = vmul.f32 %v49, %v49
    %v61 = vrot.slane %v60, 4
    %v62 = vadd.f32 %v60, %v61
    %v63 = vrot.slane %v62, 2
    %v64 = vadd.f32 %v62, %v63
    %v65 = vrot.slane %v64, 1
    %v66 = vadd.f32 %v64, %v65
    %v67 = vadd.f32 %v59, %v66
    %68 = vst [vmem:[#allocation7] sm:$0x1] %v67
    // Predicated region
    $region26: #{tpu_custom_call.1} parent=1 // pred_check
      %p69 = pneg %p34
    $region27: #{tpu_custom_call.1} parent=1 // pred_check_branch
      %71 = sbr.rel (%p69) target = $region29
    $region28: #{tpu_custom_call.1} parent=1 // pred_region
      %s72 = sld [smem:[#allocation2]]
      %s73 = scvt.s32.f32 %s72
      %v74 = vstv %s73
      %v75 = vrcp.pop %v74
      %s76 = vtos %v75
      %v77 = vld [vmem:[#allocation6] sm:$0x1]
      %v78 = vstv %s76
      %v79 = vmul.f32 %v77, %v78
      %v80 = vld [vmem:[#allocation7] sm:$0x1]
      %v81 = vmul.f32 %v80, %v78
      %v82 = vmul.f32 %v79, %v79
      %v83 = vsub.f32 %v81, %v82
      %v84 = vmax.f32 %v83, 0.0
      %v85 = vld [vmem:[%s2] sm:$0x1]
      %v86 = vadd.f32 %v84, 1e-05
      %v87 = vrsqrt.pop %v86
      %v88 = vmul.f32 %v85, %v87
      %89 = vst [vmem:[#allocation6] sm:$0x1] %v88
      %v90 = vld [vmem:[%s3] sm:$0x1]
      %v91 = vmul.f32 %v79, %v88
      %v92 = vsub.f32 %v90, %v91
      %93 = vst [vmem:[#allocation7] sm:$0x1] %v92
    $region29: #{tpu_custom_call.1} parent=1 // pred_fallthru
      _
    // Predicated region
    $region30: #{tpu_custom_call.1} parent=1 // pred_check
      _
    $region31: #{tpu_custom_call.1} parent=1 // pred_check_branch
      %95 = sbr.rel (0) target = $region33
    $region32: #{tpu_custom_call.1} parent=1 // pred_region
      %s97 = ssub.s32 16, 16
      %98 = vsyncadd [#allocation5], %s97
      %s100 = sshll.u32 [#allocation6], 4
      %s101 = int_to_ptr.vmem [resolvable:$true] %s100
      %103 = dma.vmem_to_hbm [thread:$0]  %s101, 16, %s4, [#allocation5]
    $region33: #{tpu_custom_call.1} parent=1 // pred_fallthru
      _
    // Predicated region
    $region34: #{tpu_custom_call.1} parent=1 // pred_check
      _
    $region35: #{tpu_custom_call.1} parent=1 // pred_check_branch
      %105 = sbr.rel (0) target = $region37
    $region36: #{tpu_custom_call.1} parent=1 // pred_region
      %s107 = ssub.s32 16, 16
      %108 = vsyncadd [#allocation8], %s107
      %s110 = sshll.u32 [#allocation7], 4
      %s111 = int_to_ptr.vmem [resolvable:$true] %s110
      %113 = dma.vmem_to_hbm [thread:$0]  %s111, 16, %s5, [#allocation8]
    $region37: #{tpu_custom_call.1} parent=1 // pred_fallthru
      _
    // Predicated region
    $region38: #{tpu_custom_call.1} parent=1 // pred_check
      _
    $region39: #{tpu_custom_call.1} parent=1 // pred_check_branch
      %115 = sbr.rel (0) target = $region41
    $region40: #{tpu_custom_call.1} parent=1 // pred_region
      %116 = dma.done [#allocation5], 16
    $region41: #{tpu_custom_call.1} parent=1 // pred_fallthru
      _
    // Predicated region
    $region42: #{tpu_custom_call.1} parent=1 // pred_check
      _
    $region43: #{tpu_custom_call.1} parent=1 // pred_check_branch
      %118 = sbr.rel (0) target = $region45
    $region44: #{tpu_custom_call.1} parent=1 // pred_region
      %119 = dma.done [#allocation8], 16
    $region45: #{tpu_custom_call.1} parent=1 // pred_fallthru
      _
    %120 = vsyncpa [#allocation4], 1
    %121 = vsyncpa [#allocation5], 1
    %122 = vsyncpa [#allocation8], 1

</llo_original>
